<compile_context>
chip_gen: v7x
topology: tpu7x:2x2x1
jax: 0.10.0
libtpu: 0.0.40
codegen_flags: <defaults>
</compile_context>

<pallas_src>
import jax
import jax.numpy as jnp
from jax.experimental import pallas as pl
from jax.experimental.pallas import tpu as pltpu

_LANE = 128          # TPU vreg lane width
_MAX_TILE = 4096     # batch elements (lanes) per grid step for large B


def _round_up(n, m):
    return (n + m - 1) // m * m


def _mymodel_kernel(x_ref, w1_ref, b1_ref, w2_ref, b2_ref, o_ref):
    """One (3, TILE) feature-major tile: Linear -> softmax -> Linear -> softmax.

    x_ref / o_ref : (3, TILE) VMEM blocks (features on sublanes, batch on lanes).
    w1_ref/w2_ref : (3, 3) SMEM, PyTorch (out, in) layout.  b1_ref/b2_ref: (3,) SMEM.
    Pure VPU FMAs (scalar-from-SMEM x lane-dense vector) + EUP exps; no MXU,
    no transposes, no XLU cross-lane reductions.
    """
    # Lane-dense batch rows of the input tile.
    x0 = x_ref[0:1, :]
    x1 = x_ref[1:2, :]
    x2 = x_ref[2:3, :]

    # layer_input: h_j = sum_k W1[j, k] * x_k + b1[j]
    h0 = w1_ref[0, 0] * x0 + w1_ref[0, 1] * x1 + w1_ref[0, 2] * x2 + b1_ref[0]
    h1 = w1_ref[1, 0] * x0 + w1_ref[1, 1] * x1 + w1_ref[1, 2] * x2 + b1_ref[1]
    h2 = w1_ref[2, 0] * x0 + w1_ref[2, 1] * x1 + w1_ref[2, 2] * x2 + b1_ref[2]

    # softmax over the 3 features: plain exp / sum (faithful to the module's softmax,
    # which does NOT subtract the max; logits >~88 would overflow just like the spec).
    e0, e1, e2 = jnp.exp(h0), jnp.exp(h1), jnp.exp(h2)
    inv1 = pl.reciprocal(e0 + e1 + e2, approx=False)   # 3-term VPU add, no XLU reduce
    p0, p1, p2 = e0 * inv1, e1 * inv1, e2 * inv1

    # layer_output: y_j = sum_k W2[j, k] * p_k + b2[j]
    y0 = w2_ref[0, 0] * p0 + w2_ref[0, 1] * p1 + w2_ref[0, 2] * p2 + b2_ref[0]
    y1 = w2_ref[1, 0] * p0 + w2_ref[1, 1] * p1 + w2_ref[1, 2] * p2 + b2_ref[1]
    y2 = w2_ref[2, 0] * p0 + w2_ref[2, 1] * p1 + w2_ref[2, 2] * p2 + b2_ref[2]

    f0, f1, f2 = jnp.exp(y0), jnp.exp(y1), jnp.exp(y2)
    inv2 = pl.reciprocal(f0 + f1 + f2, approx=False)

    o_ref[0:1, :] = f0 * inv2
    o_ref[1:2, :] = f1 * inv2
    o_ref[2:3, :] = f2 * inv2


def mymodel_forward(x, w1, b1, w2, b2, *, max_tile=_MAX_TILE):
    """x: (B, 3); w1/w2: (3, 3) PyTorch (out, in); b1/b2: (3,).  Returns (B, 3) f32."""
    B, F = x.shape
    assert F == 3, "mymodel is Linear(3, 3)"

    x = x.astype(jnp.float32)
    w1 = w1.astype(jnp.float32)
    b1 = b1.astype(jnp.float32)
    w2 = w2.astype(jnp.float32)
    b2 = b2.astype(jnp.float32)

    # Feature-major (lane-dense) layout: batch on the 128-wide lane axis,
    # zero-padded to a multiple of the lane tile (padded columns stay finite:
    # softmax(bias) — they are sliced off afterwards).
    tile = min(max_tile, _round_up(B, _LANE))
    bp = _round_up(B, tile)
    x_fm = jnp.pad(x.T, ((0, 0), (0, bp - B)))          # (3, Bp)

    tile_bytes = F * tile * 4
    # in + out tiles, double-buffered, plus generous compiler headroom; fits the
    # 16/32/32 MiB scoped-VMEM defaults of v5e/v6e/v7x with room to spare.
    vmem_limit = max(2 * 2 * tile_bytes * 4, 4 * 1024 * 1024)

    smem = pl.BlockSpec(memory_space=pltpu.MemorySpace.SMEM)

    out_fm = pl.pallas_call(
        _mymodel_kernel,
        out_shape=jax.ShapeDtypeStruct((F, bp), jnp.float32),
        grid_spec=pltpu.PrefetchScalarGridSpec(
            num_scalar_prefetch=0,
            grid=(bp // tile,),
            in_specs=[
                pl.BlockSpec((F, tile), lambda i: (0, i)),   # x tile (VMEM, lane-dense)
                smem, smem, smem, smem,                      # w1, b1, w2, b2 (SMEM scalars)
            ],
            out_specs=pl.BlockSpec((F, tile), lambda i: (0, i)),
        ),
        # x_fm is a kernel-private temp -> alias it to the output (saves one HBM
        # activation buffer at large B; free at small B).
        input_output_aliases={0: 0},
        compiler_params=pltpu.CompilerParams(
            dimension_semantics=("parallel",),   # shard batch tiles across TCs on v7x
            vmem_limit_bytes=int(vmem_limit),
        ),
    )(x_fm, w1, b1, w2, b2)

    return out_fm[:, :B].T                                  # back to (B, 3)


def _reference(x, w1, b1, w2, b2):
    h = x @ w1.T + b1
    p = jnp.exp(h) / jnp.sum(jnp.exp(h), axis=-1, keepdims=True)
    y = p @ w2.T + b2
    return jnp.exp(y) / jnp.sum(jnp.exp(y), axis=-1, keepdims=True)


if __name__ == "__main__":
    key = jax.random.PRNGKey(0)
    kx, kw1, kb1, kw2, kb2, kx2 = jax.random.split(key, 6)

    B, F = 8, 3  # small batch, 3 features (nn.Linear(3, 3))
    x = jax.random.normal(kx, (B, F), dtype=jnp.float32)

    # Deterministic parameter init mimicking PyTorch Linear default:
    # uniform(-1/sqrt(fan_in), 1/sqrt(fan_in)) with fan_in = 3.
    bound = 1.0 / jnp.sqrt(jnp.float32(F))
    w1 = jax.random.uniform(kw1, (F, F), jnp.float32, -bound, bound)
    b1 = jax.random.uniform(kb1, (F,), jnp.float32, -bound, bound)
    w2 = jax.random.uniform(kw2, (F, F), jnp.float32, -bound, bound)
    b2 = jax.random.uniform(kb2, (F,), jnp.float32, -bound, bound)

    out = jax.block_until_ready(mymodel_forward(x, w1, b1, w2, b2))
    ref = _reference(x, w1, b1, w2, b2)
    assert out.shape == (B, F)
    assert jnp.allclose(out, ref, atol=1e-5, rtol=1e-5), "mismatch vs reference (B=8)"

    # Exercise the padded, multi-tile grid path cheaply (B not a multiple of 128,
    # forced tile=128 -> grid=(2,)).
    B2 = 200
    x2 = jax.random.normal(kx2, (B2, F), dtype=jnp.float32)
    out2 = jax.block_until_ready(mymodel_forward(x2, w1, b1, w2, b2, max_tile=128))
    ref2 = _reference(x2, w1, b1, w2, b2)
    assert out2.shape == (B2, F)
    assert jnp.allclose(out2, ref2, atol=1e-5, rtol=1e-5), "mismatch vs reference (B=200)"

    print("KERNEL_OK")
</pallas_src>

<mosaic_0001>
module attributes {stable_mosaic.version = 11 : i64} {
  func.func @_mymodel_kernel(%arg0: i32, %arg1: memref<3x128xf32, #tpu.memory_space<vmem>>, %arg2: memref<3x3xf32, #tpu.memory_space<smem>>, %arg3: memref<3xf32, #tpu.memory_space<smem>>, %arg4: memref<3x3xf32, #tpu.memory_space<smem>>, %arg5: memref<3xf32, #tpu.memory_space<smem>>, %arg6: memref<3x128xf32, #tpu.memory_space<vmem>>) attributes {dimension_semantics = [#tpu.dimension_semantics<parallel>], iteration_bounds = array<i64: 1>, scalar_prefetch = 0 : i64, scratch_operands = 0 : i64, tpu.core_type = #tpu.core_type<tc>, window_params = [{transform_indices = @transform_0, window_bounds = array<i64: 3, 128>}, {transform_indices = @transform_1, window_bounds = array<i64: 3, 3>}, {transform_indices = @transform_2, window_bounds = array<i64: 3>}, {transform_indices = @transform_3, window_bounds = array<i64: 3, 3>}, {transform_indices = @transform_4, window_bounds = array<i64: 3>}, {transform_indices = @transform_5, window_bounds = array<i64: 3, 128>}]} {
    %c0 = arith.constant 0 : index
    %c0_0 = arith.constant 0 : index
    %0 = vector.load %arg1[%c0, %c0_0] : memref<3x128xf32, #tpu.memory_space<vmem>>, vector<1x128xf32>
    %c1 = arith.constant 1 : index
    %c0_1 = arith.constant 0 : index
    %1 = vector.load %arg1[%c1, %c0_1] : memref<3x128xf32, #tpu.memory_space<vmem>>, vector<1x128xf32>
    %c2 = arith.constant 2 : index
    %c0_2 = arith.constant 0 : index
    %2 = vector.load %arg1[%c2, %c0_2] : memref<3x128xf32, #tpu.memory_space<vmem>>, vector<1x128xf32>
    %c0_3 = arith.constant 0 : index
    %c0_4 = arith.constant 0 : index
    %3 = memref.load %arg2[%c0_3, %c0_4] : memref<3x3xf32, #tpu.memory_space<smem>>
    %4 = vector.broadcast %3 : f32 to vector<1x128xf32>
    %5 = arith.mulf %4, %0 : vector<1x128xf32>
    %c0_5 = arith.constant 0 : index
    %c1_6 = arith.constant 1 : index
    %6 = memref.load %arg2[%c0_5, %c1_6] : memref<3x3xf32, #tpu.memory_space<smem>>
    %7 = vector.broadcast %6 : f32 to vector<1x128xf32>
    %8 = arith.mulf %7, %1 : vector<1x128xf32>
    %9 = arith.addf %5, %8 : vector<1x128xf32>
    %c0_7 = arith.constant 0 : index
    %c2_8 = arith.constant 2 : index
    %10 = memref.load %arg2[%c0_7, %c2_8] : memref<3x3xf32, #tpu.memory_space<smem>>
    %11 = vector.broadcast %10 : f32 to vector<1x128xf32>
    %12 = arith.mulf %11, %2 : vector<1x128xf32>
    %13 = arith.addf %9, %12 : vector<1x128xf32>
    %c0_9 = arith.constant 0 : index
    %14 = memref.load %arg3[%c0_9] : memref<3xf32, #tpu.memory_space<smem>>
    %15 = vector.broadcast %14 : f32 to vector<1x128xf32>
    %16 = arith.addf %13, %15 : vector<1x128xf32>
    %c1_10 = arith.constant 1 : index
    %c0_11 = arith.constant 0 : index
    %17 = memref.load %arg2[%c1_10, %c0_11] : memref<3x3xf32, #tpu.memory_space<smem>>
    %18 = vector.broadcast %17 : f32 to vector<1x128xf32>
    %19 = arith.mulf %18, %0 : vector<1x128xf32>
    %c1_12 = arith.constant 1 : index
    %c1_13 = arith.constant 1 : index
    %20 = memref.load %arg2[%c1_12, %c1_13] : memref<3x3xf32, #tpu.memory_space<smem>>
    %21 = vector.broadcast %20 : f32 to vector<1x128xf32>
    %22 = arith.mulf %21, %1 : vector<1x128xf32>
    %23 = arith.addf %19, %22 : vector<1x128xf32>
    %c1_14 = arith.constant 1 : index
    %c2_15 = arith.constant 2 : index
    %24 = memref.load %arg2[%c1_14, %c2_15] : memref<3x3xf32, #tpu.memory_space<smem>>
    %25 = vector.broadcast %24 : f32 to vector<1x128xf32>
    %26 = arith.mulf %25, %2 : vector<1x128xf32>
    %27 = arith.addf %23, %26 : vector<1x128xf32>
    %c1_16 = arith.constant 1 : index
    %28 = memref.load %arg3[%c1_16] : memref<3xf32, #tpu.memory_space<smem>>
    %29 = vector.broadcast %28 : f32 to vector<1x128xf32>
    %30 = arith.addf %27, %29 : vector<1x128xf32>
    %c2_17 = arith.constant 2 : index
    %c0_18 = arith.constant 0 : index
    %31 = memref.load %arg2[%c2_17, %c0_18] : memref<3x3xf32, #tpu.memory_space<smem>>
    %32 = vector.broadcast %31 : f32 to vector<1x128xf32>
    %33 = arith.mulf %32, %0 : vector<1x128xf32>
    %c2_19 = arith.constant 2 : index
    %c1_20 = arith.constant 1 : index
    %34 = memref.load %arg2[%c2_19, %c1_20] : memref<3x3xf32, #tpu.memory_space<smem>>
    %35 = vector.broadcast %34 : f32 to vector<1x128xf32>
    %36 = arith.mulf %35, %1 : vector<1x128xf32>
    %37 = arith.addf %33, %36 : vector<1x128xf32>
    %c2_21 = arith.constant 2 : index
    %c2_22 = arith.constant 2 : index
    %38 = memref.load %arg2[%c2_21, %c2_22] : memref<3x3xf32, #tpu.memory_space<smem>>
    %39 = vector.broadcast %38 : f32 to vector<1x128xf32>
    %40 = arith.mulf %39, %2 : vector<1x128xf32>
    %41 = arith.addf %37, %40 : vector<1x128xf32>
    %c2_23 = arith.constant 2 : index
    %42 = memref.load %arg3[%c2_23] : memref<3xf32, #tpu.memory_space<smem>>
    %43 = vector.broadcast %42 : f32 to vector<1x128xf32>
    %44 = arith.addf %41, %43 : vector<1x128xf32>
    %45 = math.exp %16 : vector<1x128xf32>
    %46 = math.exp %30 : vector<1x128xf32>
    %47 = math.exp %44 : vector<1x128xf32>
    %48 = arith.addf %45, %46 : vector<1x128xf32>
    %49 = arith.addf %48, %47 : vector<1x128xf32>
    %50 = tpu.reciprocal %49 : vector<1x128xf32> -> vector<1x128xf32>
    %51 = arith.mulf %45, %50 : vector<1x128xf32>
    %52 = arith.mulf %46, %50 : vector<1x128xf32>
    %53 = arith.mulf %47, %50 : vector<1x128xf32>
    %c0_24 = arith.constant 0 : index
    %c0_25 = arith.constant 0 : index
    %54 = memref.load %arg4[%c0_24, %c0_25] : memref<3x3xf32, #tpu.memory_space<smem>>
    %55 = vector.broadcast %54 : f32 to vector<1x128xf32>
    %56 = arith.mulf %55, %51 : vector<1x128xf32>
    %c0_26 = arith.constant 0 : index
    %c1_27 = arith.constant 1 : index
    %57 = memref.load %arg4[%c0_26, %c1_27] : memref<3x3xf32, #tpu.memory_space<smem>>
    %58 = vector.broadcast %57 : f32 to vector<1x128xf32>
    %59 = arith.mulf %58, %52 : vector<1x128xf32>
    %60 = arith.addf %56, %59 : vector<1x128xf32>
    %c0_28 = arith.constant 0 : index
    %c2_29 = arith.constant 2 : index
    %61 = memref.load %arg4[%c0_28, %c2_29] : memref<3x3xf32, #tpu.memory_space<smem>>
    %62 = vector.broadcast %61 : f32 to vector<1x128xf32>
    %63 = arith.mulf %62, %53 : vector<1x128xf32>
    %64 = arith.addf %60, %63 : vector<1x128xf32>
    %c0_30 = arith.constant 0 : index
    %65 = memref.load %arg5[%c0_30] : memref<3xf32, #tpu.memory_space<smem>>
    %66 = vector.broadcast %65 : f32 to vector<1x128xf32>
    %67 = arith.addf %64, %66 : vector<1x128xf32>
    %c1_31 = arith.constant 1 : index
    %c0_32 = arith.constant 0 : index
    %68 = memref.load %arg4[%c1_31, %c0_32] : memref<3x3xf32, #tpu.memory_space<smem>>
    %69 = vector.broadcast %68 : f32 to vector<1x128xf32>
    %70 = arith.mulf %69, %51 : vector<1x128xf32>
    %c1_33 = arith.constant 1 : index
    %c1_34 = arith.constant 1 : index
    %71 = memref.load %arg4[%c1_33, %c1_34] : memref<3x3xf32, #tpu.memory_space<smem>>
    %72 = vector.broadcast %71 : f32 to vector<1x128xf32>
    %73 = arith.mulf %72, %52 : vector<1x128xf32>
    %74 = arith.addf %70, %73 : vector<1x128xf32>
    %c1_35 = arith.constant 1 : index
    %c2_36 = arith.constant 2 : index
    %75 = memref.load %arg4[%c1_35, %c2_36] : memref<3x3xf32, #tpu.memory_space<smem>>
    %76 = vector.broadcast %75 : f32 to vector<1x128xf32>
    %77 = arith.mulf %76, %53 : vector<1x128xf32>
    %78 = arith.addf %74, %77 : vector<1x128xf32>
    %c1_37 = arith.constant 1 : index
    %79 = memref.load %arg5[%c1_37] : memref<3xf32, #tpu.memory_space<smem>>
    %80 = vector.broadcast %79 : f32 to vector<1x128xf32>
    %81 = arith.addf %78, %80 : vector<1x128xf32>
    %c2_38 = arith.constant 2 : index
    %c0_39 = arith.constant 0 : index
    %82 = memref.load %arg4[%c2_38, %c0_39] : memref<3x3xf32, #tpu.memory_space<smem>>
    %83 = vector.broadcast %82 : f32 to vector<1x128xf32>
    %84 = arith.mulf %83, %51 : vector<1x128xf32>
    %c2_40 = arith.constant 2 : index
    %c1_41 = arith.constant 1 : index
    %85 = memref.load %arg4[%c2_40, %c1_41] : memref<3x3xf32, #tpu.memory_space<smem>>
    %86 = vector.broadcast %85 : f32 to vector<1x128xf32>
    %87 = arith.mulf %86, %52 : vector<1x128xf32>
    %88 = arith.addf %84, %87 : vector<1x128xf32>
    %c2_42 = arith.constant 2 : index
    %c2_43 = arith.constant 2 : index
    %89 = memref.load %arg4[%c2_42, %c2_43] : memref<3x3xf32, #tpu.memory_space<smem>>
    %90 = vector.broadcast %89 : f32 to vector<1x128xf32>
    %91 = arith.mulf %90, %53 : vector<1x128xf32>
    %92 = arith.addf %88, %91 : vector<1x128xf32>
    %c2_44 = arith.constant 2 : index
    %93 = memref.load %arg5[%c2_44] : memref<3xf32, #tpu.memory_space<smem>>
    %94 = vector.broadcast %93 : f32 to vector<1x128xf32>
    %95 = arith.addf %92, %94 : vector<1x128xf32>
    %96 = math.exp %67 : vector<1x128xf32>
    %97 = math.exp %81 : vector<1x128xf32>
    %98 = math.exp %95 : vector<1x128xf32>
    %99 = arith.addf %96, %97 : vector<1x128xf32>
    %100 = arith.addf %99, %98 : vector<1x128xf32>
    %101 = tpu.reciprocal %100 : vector<1x128xf32> -> vector<1x128xf32>
    %102 = arith.mulf %96, %101 : vector<1x128xf32>
    %c0_45 = arith.constant 0 : index
    %c0_46 = arith.constant 0 : index
    %103 = vector.load %arg6[%c0_45, %c0_46] : memref<3x128xf32, #tpu.memory_space<vmem>>, vector<1x128xf32>
    tpu.vector_store %arg6[%c0_45, %c0_46], %102 {strides = array<i32>} : memref<3x128xf32, #tpu.memory_space<vmem>>, vector<1x128xf32>,
    %104 = arith.mulf %97, %101 : vector<1x128xf32>
    %c1_47 = arith.constant 1 : index
    %c0_48 = arith.constant 0 : index
    %105 = vector.load %arg6[%c1_47, %c0_48] : memref<3x128xf32, #tpu.memory_space<vmem>>, vector<1x128xf32>
    tpu.vector_store %arg6[%c1_47, %c0_48], %104 {strides = array<i32>} : memref<3x128xf32, #tpu.memory_space<vmem>>, vector<1x128xf32>,
    %106 = arith.mulf %98, %101 : vector<1x128xf32>
    %c2_49 = arith.constant 2 : index
    %c0_50 = arith.constant 0 : index
    %107 = vector.load %arg6[%c2_49, %c0_50] : memref<3x128xf32, #tpu.memory_space<vmem>>, vector<1x128xf32>
    tpu.vector_store %arg6[%c2_49, %c0_50], %106 {strides = array<i32>} : memref<3x128xf32, #tpu.memory_space<vmem>>, vector<1x128xf32>,
    return
  }
  func.func @transform_0(%arg0: i32) -> (i32, i32) {
    %c0_i32 = arith.constant 0 : i32
    %c0_i32_0 = arith.constant 0 : i32
    return %c0_i32, %arg0 : i32, i32
  }
  func.func @transform_1(%arg0: i32) -> (i32, i32) {
    %c0_i32 = arith.constant 0 : i32
    %c0_i32_0 = arith.constant 0 : i32
    %c0_i32_1 = arith.constant 0 : i32
    return %c0_i32, %c0_i32_0 : i32, i32
  }
  func.func @transform_2(%arg0: i32) -> i32 {
    %c0_i32 = arith.constant 0 : i32
    %c0_i32_0 = arith.constant 0 : i32
    return %c0_i32 : i32
  }
  func.func @transform_3(%arg0: i32) -> (i32, i32) {
    %c0_i32 = arith.constant 0 : i32
    %c0_i32_0 = arith.constant 0 : i32
    %c0_i32_1 = arith.constant 0 : i32
    return %c0_i32, %c0_i32_0 : i32, i32
  }
  func.func @transform_4(%arg0: i32) -> i32 {
    %c0_i32 = arith.constant 0 : i32
    %c0_i32_0 = arith.constant 0 : i32
    return %c0_i32 : i32
  }
  func.func @transform_5(%arg0: i32) -> (i32, i32) {
    %c0_i32 = arith.constant 0 : i32
    %c0_i32_0 = arith.constant 0 : i32
    return %c0_i32, %arg0 : i32, i32
  }
}

</mosaic_0001>

<llo_original>
// kernel: tpu_custom_call.1
$region0: #{tpu_custom_call.1}
  #allocation0 [shape = 'u32[]', space=smem, size = 0x4, offset = 0x4, fixed_abs, tag = 'smem constant byte address 0x4 - core index']
  #allocation1 [shape = 'u32[144,128]{1,0:T(1,128)}', space=vmem, size = 0x12000, scoped, tag = 'internal scratch']
  %s0 = inlined_call_operand.hbm [shape: f32[3,128], index: 0, kind: input, shape index: {}, may-alias: {0,5}]
  %s1 = inlined_call_operand.vmem [shape: f32[3,3], index: 1, kind: input, shape index: {}]
  %s2 = inlined_call_operand.vmem [shape: f32[3], index: 2, kind: input, shape index: {}]
  %s3 = inlined_call_operand.vmem [shape: f32[3,3], index: 3, kind: input, shape index: {}]
  %s4 = inlined_call_operand.vmem [shape: f32[3], index: 4, kind: input, shape index: {}]
  %s5 = inlined_call_operand.hbm [shape: f32[3,128], index: 5, kind: output, shape index: {}, may-alias: {0,5}]
  %s6 = sld [smem:[#allocation0]]
  $region50: #{tpu_custom_call.1} parent=0
    _
  %s8 = ssub.s32 1, %s6
  %s9 = scalar_select 0, %s8, %s6
  $region1: #{tpu_custom_call.1} parent=0
    #allocation2 [shape = 'u8[2048]{0}', space=vmem, size = 0x800, scoped, tag = 'input window, operand 0, single buffered']
    #allocation3 [shape = 's32[1]{0}', space=sflag, size = 0x4, scoped, tag = 'scoped memory for tpu_custom_call.1']
    #allocation4 [shape = 's32[1]{0}', space=sflag, size = 0x4, scoped, tag = 'scoped memory for tpu_custom_call.1']
    #allocation5 [shape = 's32[1]{0}', space=sflag, size = 0x4, scoped, tag = 'scoped memory for tpu_custom_call.1']
    #allocation6 [shape = 'u8[2048]{0}', space=smem, size = 0x800, scoped, tag = 'input window, operand 1, single buffered']
    #allocation7 [shape = 'u8[512]{0}', space=smem, size = 0x200, scoped, tag = 'input window, operand 2, single buffered']
    #allocation8 [shape = 's32[1]{0}', space=sflag, size = 0x4, scoped, tag = 'scoped memory for tpu_custom_call.1']
    #allocation9 [shape = 'u8[2048]{0}', space=smem, size = 0x800, scoped, tag = 'input window, operand 3, single buffered']
    #allocation10 [shape = 'u8[512]{0}', space=smem, size = 0x200, scoped, tag = 'input window, operand 4, single buffered']
    #allocation11 [shape = 's32[1]{0}', space=sflag, size = 0x4, scoped, tag = 'scoped memory for tpu_custom_call.1']
    #allocation12 [shape = 'u8[2048]{0}', space=vmem, size = 0x800, scoped, tag = 'output window, operand 0, single buffered']
    %10 = vsyncpa [#allocation3], 0
    %11 = vsyncpa [#allocation5], 0
    %12 = vsyncpa [#allocation8], 0
    %13 = vsyncpa [#allocation11], 0
    %14 = vsyncpa [#allocation4], 0
    // Predicated region
    $region2: #{tpu_custom_call.1} parent=1 // pred_check
      _
    $region3: #{tpu_custom_call.1} parent=1 // pred_check_branch
      %16 = sbr.rel (0) target = $region5
    $region4: #{tpu_custom_call.1} parent=1 // pred_region
      %s18 = ssub.s32 64, 64
      %19 = vsyncadd [#allocation3], %s18
      %s21 = sshll.u32 [#allocation2], 4
      %s22 = int_to_ptr.vmem [resolvable:$true] %s21
      %24 = dma.hbm_to_vmem [thread:$0]  %s0, 64, %s22, [#allocation3]
    $region5: #{tpu_custom_call.1} parent=1 // pred_fallthru
      _
    // Predicated region
    $region6: #{tpu_custom_call.1} parent=1 // pred_check
      _
    $region7: #{tpu_custom_call.1} parent=1 // pred_check_branch
      %26 = sbr.rel (0) target = $region9
    $region8: #{tpu_custom_call.1} parent=1 // pred_region
      %s28 = ssub.s32 64, 64
      %29 = vsyncadd [#allocation5], %s28
      %s31 = sshll.u32 %s1, 4
      %s32 = int_to_ptr.vmem [resolvable:$true] %s31
      %34 = dma.vmem_to_smem %s32, 64, [#allocation6], [#allocation5]
    $region9: #{tpu_custom_call.1} parent=1 // pred_fallthru
      _
    // Predicated region
    $region10: #{tpu_custom_call.1} parent=1 // pred_check
      _
    $region11: #{tpu_custom_call.1} parent=1 // pred_check_branch
      %36 = sbr.rel (0) target = $region13
    $region12: #{tpu_custom_call.1} parent=1 // pred_region
      %s38 = ssub.s32 16, 16
      %39 = vsyncadd [#allocation8], %s38
      %s41 = sshll.u32 %s2, 4
      %s42 = int_to_ptr.vmem [resolvable:$true] %s41
      %44 = dma.vmem_to_smem %s42, 16, [#allocation7], [#allocation8]
    $region13: #{tpu_custom_call.1} parent=1 // pred_fallthru
      _
    // Predicated region
    $region14: #{tpu_custom_call.1} parent=1 // pred_check
      _
    $region15: #{tpu_custom_call.1} parent=1 // pred_check_branch
      %46 = sbr.rel (0) target = $region17
    $region16: #{tpu_custom_call.1} parent=1 // pred_region
      %s48 = ssub.s32 64, 64
      %49 = vsyncadd [#allocation8], %s48
      %s51 = sshll.u32 %s3, 4
      %s52 = int_to_ptr.vmem [resolvable:$true] %s51
      %54 = dma.vmem_to_smem %s52, 64, [#allocation9], [#allocation8]
    $region17: #{tpu_custom_call.1} parent=1 // pred_fallthru
      _
    // Predicated region
    $region18: #{tpu_custom_call.1} parent=1 // pred_check
      _
    $region19: #{tpu_custom_call.1} parent=1 // pred_check_branch
      %56 = sbr.rel (0) target = $region21
    $region20: #{tpu_custom_call.1} parent=1 // pred_region
      %s58 = ssub.s32 16, 16
      %59 = vsyncadd [#allocation11], %s58
      %s61 = sshll.u32 %s4, 4
      %s62 = int_to_ptr.vmem [resolvable:$true] %s61
      %64 = dma.vmem_to_smem %s62, 16, [#allocation10], [#allocation11]
    $region21: #{tpu_custom_call.1} parent=1 // pred_fallthru
      _
    // Predicated region
    $region22: #{tpu_custom_call.1} parent=1 // pred_check
      _
    $region23: #{tpu_custom_call.1} parent=1 // pred_check_branch
      %66 = sbr.rel (0) target = $region25
    $region24: #{tpu_custom_call.1} parent=1 // pred_region
      %67 = dma.done [#allocation3], 64
    $region25: #{tpu_custom_call.1} parent=1 // pred_fallthru
      _
    // Predicated region
    $region26: #{tpu_custom_call.1} parent=1 // pred_check
      _
    $region27: #{tpu_custom_call.1} parent=1 // pred_check_branch
      %69 = sbr.rel (0) target = $region29
    $region28: #{tpu_custom_call.1} parent=1 // pred_region
      %70 = dma.done [#allocation5], 64
    $region29: #{tpu_custom_call.1} parent=1 // pred_fallthru
      _
    // Predicated region
    $region30: #{tpu_custom_call.1} parent=1 // pred_check
      _
    $region31: #{tpu_custom_call.1} parent=1 // pred_check_branch
      %72 = sbr.rel (0) target = $region33
    $region32: #{tpu_custom_call.1} parent=1 // pred_region
      %73 = dma.done [#allocation8], 16
    $region33: #{tpu_custom_call.1} parent=1 // pred_fallthru
      _
    // Predicated region
    $region34: #{tpu_custom_call.1} parent=1 // pred_check
      _
    $region35: #{tpu_custom_call.1} parent=1 // pred_check_branch
      %75 = sbr.rel (0) target = $region37
    $region36: #{tpu_custom_call.1} parent=1 // pred_region
      %76 = dma.done [#allocation8], 64
    $region37: #{tpu_custom_call.1} parent=1 // pred_fallthru
      _
    // Predicated region
    $region38: #{tpu_custom_call.1} parent=1 // pred_check
      _
    $region39: #{tpu_custom_call.1} parent=1 // pred_check_branch
      %78 = sbr.rel (0) target = $region41
    $region40: #{tpu_custom_call.1} parent=1 // pred_region
      %79 = dma.done [#allocation11], 16
    $region41: #{tpu_custom_call.1} parent=1 // pred_fallthru
      _
    %80 = sfence
    %v81 = vld [vmem:[#allocation2] sm:$0x1]
    %v82 = vld [vmem:[#allocation2 + $0x1] sm:$0x1]
    %v83 = vld [vmem:[#allocation2 + $0x2] sm:$0x1]
    %s84 = sld [smem:[#allocation6]]
    %v85 = vstv %s84
    %v86 = vmul.f32 %v85, %v81
    %s87 = sld [smem:[#allocation6 + $0x1]]
    %v88 = vstv %s87
    %v89 = vmul.f32 %v88, %v82
    %v90 = vadd.f32 %v86, %v89
    %s91 = sld [smem:[#allocation6 + $0x2]]
    %v92 = vstv %s91
    %v93 = vmul.f32 %v92, %v83
    %v94 = vadd.f32 %v90, %v93
    %s95 = sld [smem:[#allocation7]]
    %v96 = vstv %s95
    %v97 = vadd.f32 %v94, %v96
    %s98 = sld [smem:[#allocation6 + $0x80]]
    %v99 = vstv %s98
    %v100 = vmul.f32 %v99, %v81
    %s101 = sld [smem:[#allocation6 + $0x81]]
    %v102 = vstv %s101
    %v103 = vmul.f32 %v102, %v82
    %v104 = vadd.f32 %v100, %v103
    %s105 = sld [smem:[#allocation6 + $0x82]]
    %v106 = vstv %s105
    %v107 = vmul.f32 %v106, %v83
    %v108 = vadd.f32 %v104, %v107
    %s109 = sld [smem:[#allocation7 + $0x1]]
    %v110 = vstv %s109
    %v111 = vadd.f32 %v108, %v110
    %s112 = sld [smem:[#allocation6 + $0x100]]
    %v113 = vstv %s112
    %v114 = vmul.f32 %v113, %v81
    %s115 = sld [smem:[#allocation6 + $0x101]]
    %v116 = vstv %s115
    %v117 = vmul.f32 %v116, %v82
    %v118 = vadd.f32 %v114, %v117
    %s119 = sld [smem:[#allocation6 + $0x102]]
    %v120 = vstv %s119
    %v121 = vmul.f32 %v120, %v83
    %v122 = vadd.f32 %v118, %v121
    %s123 = sld [smem:[#allocation7 + $0x2]]
    %v124 = vstv %s123
    %v125 = vadd.f32 %v122, %v124
    %v126 = vmul.f32 %v97, 1.442695
    %v127 = vpow.pop %v126
    %v128 = vmul.f32 %v111, 1.442695
    %v129 = vpow.pop %v128
    %v130 = vmul.f32 %v125, 1.442695
    %v131 = vpow.pop %v130
    %v132 = vadd.f32 %v127, %v129
    %v133 = vadd.f32 %v132, %v131
    %v134 = vrcp.pop %v133
    %v135 = vmul.f32 %v127, %v134
    %v136 = vmul.f32 %v129, %v134
    %v137 = vmul.f32 %v131, %v134
    %s138 = sld [smem:[#allocation9]]
    %v139 = vstv %s138
    %v140 = vmul.f32 %v139, %v135
    %s141 = sld [smem:[#allocation9 + $0x1]]
    %v142 = vstv %s141
    %v143 = vmul.f32 %v142, %v136
    %v144 = vadd.f32 %v140, %v143
    %s145 = sld [smem:[#allocation9 + $0x2]]
    %v146 = vstv %s145
    %v147 = vmul.f32 %v146, %v137
    %v148 = vadd.f32 %v144, %v147
    %s149 = sld [smem:[#allocation10]]
    %v150 = vstv %s149
    %v151 = vadd.f32 %v148, %v150
    %s152 = sld [smem:[#allocation9 + $0x80]]
    %v153 = vstv %s152
    %v154 = vmul.f32 %v153, %v135
    %s155 = sld [smem:[#allocation9 + $0x81]]
    %v156 = vstv %s155
    %v157 = vmul.f32 %v156, %v136
    %v158 = vadd.f32 %v154, %v157
    %s159 = sld [smem:[#allocation9 + $0x82]]
    %v160 = vstv %s159
    %v161 = vmul.f32 %v160, %v137
    %v162 = vadd.f32 %v158, %v161
    %s163 = sld [smem:[#allocation10 + $0x1]]
    %v164 = vstv %s163
    %v165 = vadd.f32 %v162, %v164
    %s166 = sld [smem:[#allocation9 + $0x100]]
    %v167 = vstv %s166
    %v168 = vmul.f32 %v167, %v135
    %s169 = sld [smem:[#allocation9 + $0x101]]
    %v170 = vstv %s169
    %v171 = vmul.f32 %v170, %v136
    %v172 = vadd.f32 %v168, %v171
    %s173 = sld [smem:[#allocation9 + $0x102]]
    %v174 = vstv %s173
    %v175 = vmul.f32 %v174, %v137
    %v176 = vadd.f32 %v172, %v175
    %s177 = sld [smem:[#allocation10 + $0x2]]
    %v178 = vstv %s177
    %v179 = vadd.f32 %v176, %v178
    %v180 = vmul.f32 %v151, 1.442695
    %v181 = vpow.pop %v180
    %v182 = vmul.f32 %v165, 1.442695
    %v183 = vpow.pop %v182
    %v184 = vmul.f32 %v179, 1.442695
    %v185 = vpow.pop %v184
    %v186 = vadd.f32 %v181, %v183
    %v187 = vadd.f32 %v186, %v185
    %v188 = vrcp.pop %v187
    %v189 = vmul.f32 %v181, %v188
    %190 = vst [vmem:[#allocation12] sm:$0x1] %v189
    %v191 = vmul.f32 %v183, %v188
    %192 = vst [vmem:[#allocation12 + $0x1] sm:$0x1] %v191
    %v193 = vmul.f32 %v185, %v188
    %194 = vst [vmem:[#allocation12 + $0x2] sm:$0x1] %v193
    // Predicated region
    $region42: #{tpu_custom_call.1} parent=1 // pred_check
      _
    $region43: #{tpu_custom_call.1} parent=1 // pred_check_branch
      %196 = sbr.rel (0) target = $region45
    $region44: #{tpu_custom_call.1} parent=1 // pred_region
      %s198 = ssub.s32 64, 64
      %199 = vsyncadd [#allocation4], %s198
      %s201 = sshll.u32 [#allocation12], 4
      %s202 = int_to_ptr.vmem [resolvable:$true] %s201
      %204 = dma.vmem_to_hbm [thread:$0]  %s202, 64, %s5, [#allocation4]
    $region45: #{tpu_custom_call.1} parent=1 // pred_fallthru
      _
    // Predicated region
    $region46: #{tpu_custom_call.1} parent=1 // pred_check
      _
    $region47: #{tpu_custom_call.1} parent=1 // pred_check_branch
      %206 = sbr.rel (0) target = $region49
    $region48: #{tpu_custom_call.1} parent=1 // pred_region
      %207 = dma.done [#allocation4], 64
    $region49: #{tpu_custom_call.1} parent=1 // pred_fallthru
      _
    %208 = vsyncpa [#allocation3], 1
    %209 = vsyncpa [#allocation4], 1
    %210 = vsyncpa [#allocation5], 1
    %211 = vsyncpa [#allocation8], 1
    %212 = vsyncpa [#allocation11], 1

</llo_original>
